<compile_context>
chip_gen: v6e
topology: v6e:2x2x1
jax: 0.10.0
libtpu: 0.0.40
codegen_flags: <defaults>
</compile_context>

<pallas_src>
import functools

import jax
import jax.numpy as jnp
from jax.experimental import pallas as pl
from jax.experimental.pallas import tpu as pltpu

EPS = 1e-5


def basic_block_kernel(xpad_ref, k1_ref, k2_ref, g1_ref, b1_ref, g2_ref, b2_ref,
                       out_ref, ypad_ref, *, C):
    """Grid-less kernel; everything resident in VMEM.

    xpad_ref : (N, H+2, W*C) f32, lane-dense rows, 1-row zero halo top/bottom per image
    k*_ref   : (3, W*C, W*C) bf16 banded conv matrices (one per dy tap)
    g*/b*_ref: (1, W*C) f32 gamma/beta pre-tiled across the W lane-blocks
    out_ref  : (N*H, W*C) f32
    ypad_ref : (N, H+2, W*C) f32 scratch for the re-padded intermediate activation
    """
    N, Hp, WC = xpad_ref.shape
    H = Hp - 2
    M = N * H
    W = WC // C
    inv_cnt = 1.0 / float(M * W)  # BN sample count = N*H*W

    x_f32 = xpad_ref[...]  # used for conv1 taps and the residual

    def conv_banded(src, k_ref):
        # 3x3 conv == sum over dy of (row-shifted activations) @ (banded weight matrix).
        acc = jnp.zeros((M, WC), jnp.float32)
        for dy in range(3):
            rows = src[:, dy:dy + H, :].reshape(M, WC).astype(jnp.bfloat16)
            acc = acc + jnp.dot(rows, k_ref[dy],
                                preferred_element_type=jnp.float32)
        return acc

    def bn_scale_shift(y, g_l, b_l):
        # Single-pass training-mode BN: per-channel sum & sum-of-squares.
        s1 = jnp.sum(y, axis=0, keepdims=True)       # (1, W*C)
        s2 = jnp.sum(y * y, axis=0, keepdims=True)   # (1, W*C)
        # Circular all-reduce across the W lane-blocks (channel c lives on lanes c mod C).
        sh = C
        while sh < WC:
            s1 = s1 + pltpu.roll(s1, shift=sh, axis=1)
            s2 = s2 + pltpu.roll(s2, shift=sh, axis=1)
            sh *= 2
        mean = s1 * inv_cnt
        var = s2 * inv_cnt - mean * mean
        scale = g_l * jax.lax.rsqrt(var + EPS)       # (1, W*C)
        shift = b_l - mean * scale                   # (1, W*C)
        return scale, shift

    # ---- conv1 -> bn1 -> relu ----
    y = conv_banded(x_f32, k1_ref)                                   # (M, WC) f32
    sc1, sh1 = bn_scale_shift(y, g1_ref[...], b1_ref[...])
    y = jnp.maximum(y * sc1 + sh1, 0.0)

    # re-pad rows for conv2: only the 1-row halo is zero-filled
    zero_row = jnp.zeros((N, 1, WC), jnp.float32)
    ypad_ref[:, 0:1, :] = zero_row
    ypad_ref[:, Hp - 1:Hp, :] = zero_row
    ypad_ref[:, 1:1 + H, :] = y.reshape(N, H, WC)

    # ---- conv2 -> bn2 -> (+residual) -> relu (fused epilogue) ----
    z = conv_banded(ypad_ref[...], k2_ref)                           # (M, WC) f32
    sc2, sh2 = bn_scale_shift(z, g2_ref[...], b2_ref[...])
    residual = x_f32[:, 1:1 + H, :].reshape(M, WC)
    out_ref[...] = jnp.maximum(z * sc2 + sh2 + residual, 0.0)


def build_band_matrices(w_hwio, W, dtype=jnp.bfloat16):
    """(3,3,C,C) HWIO conv weights -> (3, W*C, W*C) banded matrices K[dy] so that
    lane-dense row (layout w*C + ci) @ K[dy] implements the 3 dx taps of the 3x3 conv
    (including the zero padding at the width boundaries)."""
    C = w_hwio.shape[2]
    wi = jnp.arange(W)[:, None]            # input spatial position
    wo = jnp.arange(W)[None, :]            # output spatial position
    d = wi - wo + 1                        # dx tap index
    valid = (d >= 0) & (d <= 2)
    blocks = w_hwio[:, jnp.clip(d, 0, 2), :, :]                      # (3, W, W, C, C)
    blocks = jnp.where(valid[None, :, :, None, None], blocks, 0.0)
    k = blocks.transpose(0, 1, 3, 2, 4).reshape(3, W * C, W * C)
    return k.astype(dtype)


def basic_block_forward(x_nchw, params):
    """x_nchw: (N, C, H, W) float32; returns (N, C, H, W)."""
    w1, g1, b1, w2, g2, b2 = params
    x = jnp.transpose(x_nchw, (0, 2, 3, 1)).astype(jnp.float32)      # NCHW -> NHWC
    N, H, W, C = x.shape
    WC = W * C
    assert W & (W - 1) == 0, "roll-based per-channel reduction assumes power-of-two W"

    # lane-dense, row-padded activations: (N, H+2, W*C), rows 0 and H+1 are zero
    xpad = jnp.pad(x.reshape(N, H, WC), ((0, 0), (1, 1), (0, 0)))

    k1 = build_band_matrices(w1, W)                                  # (3, WC, WC) bf16
    k2 = build_band_matrices(w2, W)

    # gamma/beta tiled so lane w*C + c holds the value for channel c
    g1l = jnp.tile(g1, W).reshape(1, WC)
    b1l = jnp.tile(b1, W).reshape(1, WC)
    g2l = jnp.tile(g2, W).reshape(1, WC)
    b2l = jnp.tile(b2, W).reshape(1, WC)

    kernel = functools.partial(basic_block_kernel, C=C)

    out2d = pl.pallas_call(
        kernel,
        out_shape=jax.ShapeDtypeStruct((N * H, WC), jnp.float32),
        in_specs=[pl.BlockSpec(memory_space=pltpu.MemorySpace.VMEM)] * 7,
        out_specs=pl.BlockSpec(memory_space=pltpu.MemorySpace.VMEM),
        scratch_shapes=[pltpu.VMEM((N, H + 2, WC), jnp.float32)],
    )(xpad, k1, k2, g1l, b1l, g2l, b2l)

    out = out2d.reshape(N, H, W, C)
    return jnp.transpose(out, (0, 3, 1, 2))                          # NHWC -> NCHW


def basic_block_reference(x_nchw, params):
    """Pure-JAX f32 reference (lax conv) for verification."""
    w1, g1, b1, w2, g2, b2 = params
    x = jnp.transpose(x_nchw, (0, 2, 3, 1)).astype(jnp.float32)

    def conv(a, w):
        return jax.lax.conv_general_dilated(
            a, w, window_strides=(1, 1), padding="SAME",
            dimension_numbers=("NHWC", "HWIO", "NHWC"))

    def bn(a, g, b):
        m = a.mean(axis=(0, 1, 2))
        v = ((a - m) ** 2).mean(axis=(0, 1, 2))
        return (a - m) / jnp.sqrt(v + EPS) * g + b

    y = jnp.maximum(bn(conv(x, w1), g1, b1), 0.0)
    z = bn(conv(y, w2), g2, b2)
    out = jnp.maximum(z + x, 0.0)
    return jnp.transpose(out, (0, 3, 1, 2))


def init_params(key, channels):
    k1, k2, k3, k4, k5, k6 = jax.random.split(key, 6)
    # Conv2d(C, C, 3, padding=1, bias=False) weights in HWIO layout (synthetic init).
    w1 = jax.random.normal(k1, (3, 3, channels, channels), jnp.float32) * 0.1
    w2 = jax.random.normal(k2, (3, 3, channels, channels), jnp.float32) * 0.1
    # Non-trivial BN affine params to exercise the folded scale/shift path.
    g1 = 1.0 + 0.2 * jax.random.normal(k3, (channels,), jnp.float32)
    b1 = 0.1 * jax.random.normal(k4, (channels,), jnp.float32)
    g2 = 1.0 + 0.2 * jax.random.normal(k5, (channels,), jnp.float32)
    b2 = 0.1 * jax.random.normal(k6, (channels,), jnp.float32)
    return (w1, g1, b1, w2, g2, b2)


if __name__ == "__main__":
    key = jax.random.PRNGKey(0)
    kx, kp = jax.random.split(key)

    N, C, H, W = 2, 8, 16, 16          # W*C = 128 -> exactly lane-dense
    x = jax.random.normal(kx, (N, C, H, W), jnp.float32)
    params = init_params(kp, C)

    out = jax.block_until_ready(basic_block_forward(x, params))
    ref = jax.block_until_ready(basic_block_reference(x, params))

    assert out.shape == (N, C, H, W)
    max_err = float(jnp.max(jnp.abs(out - ref)))
    # bf16 MXU operands (f32 accumulation) vs f32 reference -> relaxed tolerance.
    assert jnp.allclose(out, ref, atol=2e-2, rtol=2e-2), max_err
    print("KERNEL_OK")
</pallas_src>

<mosaic_0001>
module attributes {stable_mosaic.version = 11 : i64} {
  func.func @basic_block_kernel(%arg0: memref<2x18x128xf32, #tpu.memory_space<vmem>>, %arg1: memref<3x128x128xbf16, #tpu.memory_space<vmem>>, %arg2: memref<3x128x128xbf16, #tpu.memory_space<vmem>>, %arg3: memref<1x128xf32, #tpu.memory_space<vmem>>, %arg4: memref<1x128xf32, #tpu.memory_space<vmem>>, %arg5: memref<1x128xf32, #tpu.memory_space<vmem>>, %arg6: memref<1x128xf32, #tpu.memory_space<vmem>>, %arg7: memref<32x128xf32, #tpu.memory_space<vmem>>, %arg8: memref<2x18x128xf32, #tpu.memory_space<vmem>>) attributes {dimension_semantics = [], scalar_prefetch = 0 : i64, scratch_operands = 1 : i64, tpu.core_type = #tpu.core_type<tc>} {
    %c0 = arith.constant 0 : index
    %c0_0 = arith.constant 0 : index
    %c0_1 = arith.constant 0 : index
    %0 = vector.load %arg0[%c0, %c0_0, %c0_1] : memref<2x18x128xf32, #tpu.memory_space<vmem>>, vector<2x18x128xf32>
    %cst = arith.constant 0.000000e+00 : f32
    %1 = vector.broadcast %cst : f32 to vector<32x128xf32>
    %2 = vector.extract_strided_slice %0 {offsets = [0, 0, 0], sizes = [2, 16, 128], strides = [1, 1, 1]} : vector<2x18x128xf32> to vector<2x16x128xf32>
    %3 = vector.shape_cast %2 : vector<2x16x128xf32> to vector<32x128xf32>
    %4 = arith.truncf %3 : vector<32x128xf32> to vector<32x128xbf16>
    %c0_2 = arith.constant 0 : index
    %c0_3 = arith.constant 0 : index
    %c0_4 = arith.constant 0 : index
    %5 = vector.load %arg1[%c0_2, %c0_3, %c0_4] : memref<3x128x128xbf16, #tpu.memory_space<vmem>>, vector<1x128x128xbf16>
    %6 = vector.shape_cast %5 : vector<1x128x128xbf16> to vector<128x128xbf16>
    %cst_5 = arith.constant dense<0.000000e+00> : vector<32x128xf32>
    %7 = tpu.matmul %4, %6, %cst_5 {dimension_numbers = #tpu.dot_dimension_numbers<[1], [0], [0], [1], [0, 0, 1, 1], [], []>} : vector<32x128xbf16>, vector<128x128xbf16>, vector<32x128xf32> -> vector<32x128xf32>
    %8 = arith.addf %1, %7 : vector<32x128xf32>
    %9 = vector.extract_strided_slice %0 {offsets = [0, 1, 0], sizes = [2, 16, 128], strides = [1, 1, 1]} : vector<2x18x128xf32> to vector<2x16x128xf32>
    %10 = vector.shape_cast %9 : vector<2x16x128xf32> to vector<32x128xf32>
    %11 = arith.truncf %10 : vector<32x128xf32> to vector<32x128xbf16>
    %c1 = arith.constant 1 : index
    %c0_6 = arith.constant 0 : index
    %c0_7 = arith.constant 0 : index
    %12 = vector.load %arg1[%c1, %c0_6, %c0_7] : memref<3x128x128xbf16, #tpu.memory_space<vmem>>, vector<1x128x128xbf16>
    %13 = vector.shape_cast %12 : vector<1x128x128xbf16> to vector<128x128xbf16>
    %cst_8 = arith.constant dense<0.000000e+00> : vector<32x128xf32>
    %14 = tpu.matmul %11, %13, %cst_8 {dimension_numbers = #tpu.dot_dimension_numbers<[1], [0], [0], [1], [0, 0, 1, 1], [], []>} : vector<32x128xbf16>, vector<128x128xbf16>, vector<32x128xf32> -> vector<32x128xf32>
    %15 = arith.addf %8, %14 : vector<32x128xf32>
    %16 = vector.extract_strided_slice %0 {offsets = [0, 2, 0], sizes = [2, 16, 128], strides = [1, 1, 1]} : vector<2x18x128xf32> to vector<2x16x128xf32>
    %17 = vector.shape_cast %16 : vector<2x16x128xf32> to vector<32x128xf32>
    %18 = arith.truncf %17 : vector<32x128xf32> to vector<32x128xbf16>
    %c2 = arith.constant 2 : index
    %c0_9 = arith.constant 0 : index
    %c0_10 = arith.constant 0 : index
    %19 = vector.load %arg1[%c2, %c0_9, %c0_10] : memref<3x128x128xbf16, #tpu.memory_space<vmem>>, vector<1x128x128xbf16>
    %20 = vector.shape_cast %19 : vector<1x128x128xbf16> to vector<128x128xbf16>
    %cst_11 = arith.constant dense<0.000000e+00> : vector<32x128xf32>
    %21 = tpu.matmul %18, %20, %cst_11 {dimension_numbers = #tpu.dot_dimension_numbers<[1], [0], [0], [1], [0, 0, 1, 1], [], []>} : vector<32x128xbf16>, vector<128x128xbf16>, vector<32x128xf32> -> vector<32x128xf32>
    %22 = arith.addf %15, %21 : vector<32x128xf32>
    %c0_12 = arith.constant 0 : index
    %c0_13 = arith.constant 0 : index
    %23 = vector.load %arg3[%c0_12, %c0_13] : memref<1x128xf32, #tpu.memory_space<vmem>>, vector<1x128xf32>
    %c0_14 = arith.constant 0 : index
    %c0_15 = arith.constant 0 : index
    %24 = vector.load %arg4[%c0_14, %c0_15] : memref<1x128xf32, #tpu.memory_space<vmem>>, vector<1x128xf32>
    %cst_16 = arith.constant dense<0.000000e+00> : vector<128xf32>
    %25 = vector.multi_reduction <add>, %22, %cst_16 [0] : vector<32x128xf32> to vector<128xf32>
    %26 = vector.shape_cast %25 : vector<128xf32> to vector<1x128xf32>
    %27 = arith.mulf %22, %22 : vector<32x128xf32>
    %cst_17 = arith.constant dense<0.000000e+00> : vector<128xf32>
    %28 = vector.multi_reduction <add>, %27, %cst_17 [0] : vector<32x128xf32> to vector<128xf32>
    %29 = vector.shape_cast %28 : vector<128xf32> to vector<1x128xf32>
    %c8_i32 = arith.constant 8 : i32
    %30 = tpu.dynamic_rotate %26 by %c8_i32 dim 1 : vector<1x128xf32>, i32 -> vector<1x128xf32>
    %31 = arith.addf %26, %30 : vector<1x128xf32>
    %c8_i32_18 = arith.constant 8 : i32
    %32 = tpu.dynamic_rotate %29 by %c8_i32_18 dim 1 : vector<1x128xf32>, i32 -> vector<1x128xf32>
    %33 = arith.addf %29, %32 : vector<1x128xf32>
    %c16_i32 = arith.constant 16 : i32
    %34 = tpu.dynamic_rotate %31 by %c16_i32 dim 1 : vector<1x128xf32>, i32 -> vector<1x128xf32>
    %35 = arith.addf %31, %34 : vector<1x128xf32>
    %c16_i32_19 = arith.constant 16 : i32
    %36 = tpu.dynamic_rotate %33 by %c16_i32_19 dim 1 : vector<1x128xf32>, i32 -> vector<1x128xf32>
    %37 = arith.addf %33, %36 : vector<1x128xf32>
    %c32_i32 = arith.constant 32 : i32
    %38 = tpu.dynamic_rotate %35 by %c32_i32 dim 1 : vector<1x128xf32>, i32 -> vector<1x128xf32>
    %39 = arith.addf %35, %38 : vector<1x128xf32>
    %c32_i32_20 = arith.constant 32 : i32
    %40 = tpu.dynamic_rotate %37 by %c32_i32_20 dim 1 : vector<1x128xf32>, i32 -> vector<1x128xf32>
    %41 = arith.addf %37, %40 : vector<1x128xf32>
    %c64_i32 = arith.constant 64 : i32
    %42 = tpu.dynamic_rotate %39 by %c64_i32 dim 1 : vector<1x128xf32>, i32 -> vector<1x128xf32>
    %43 = arith.addf %39, %42 : vector<1x128xf32>
    %c64_i32_21 = arith.constant 64 : i32
    %44 = tpu.dynamic_rotate %41 by %c64_i32_21 dim 1 : vector<1x128xf32>, i32 -> vector<1x128xf32>
    %45 = arith.addf %41, %44 : vector<1x128xf32>
    %cst_22 = arith.constant 0.001953125 : f32
    %46 = vector.broadcast %cst_22 : f32 to vector<1x128xf32>
    %47 = arith.mulf %43, %46 : vector<1x128xf32>
    %cst_23 = arith.constant 0.001953125 : f32
    %48 = vector.broadcast %cst_23 : f32 to vector<1x128xf32>
    %49 = arith.mulf %45, %48 : vector<1x128xf32>
    %50 = arith.mulf %47, %47 : vector<1x128xf32>
    %51 = arith.subf %49, %50 : vector<1x128xf32>
    %cst_24 = arith.constant 9.99999974E-6 : f32
    %52 = vector.broadcast %cst_24 : f32 to vector<1x128xf32>
    %53 = arith.addf %51, %52 : vector<1x128xf32>
    %54 = math.rsqrt %53 : vector<1x128xf32>
    %55 = arith.mulf %23, %54 : vector<1x128xf32>
    %56 = arith.mulf %47, %55 : vector<1x128xf32>
    %57 = arith.subf %24, %56 : vector<1x128xf32>
    %58 = vector.broadcast %55 : vector<1x128xf32> to vector<32x128xf32>
    %59 = arith.mulf %22, %58 : vector<32x128xf32>
    %60 = vector.broadcast %57 : vector<1x128xf32> to vector<32x128xf32>
    %61 = arith.addf %59, %60 : vector<32x128xf32>
    %cst_25 = arith.constant 0.000000e+00 : f32
    %62 = vector.broadcast %cst_25 : f32 to vector<32x128xf32>
    %63 = arith.maximumf %61, %62 : vector<32x128xf32>
    %cst_26 = arith.constant 0.000000e+00 : f32
    %64 = vector.broadcast %cst_26 : f32 to vector<2x1x128xf32>
    %c0_27 = arith.constant 0 : index
    %c0_28 = arith.constant 0 : index
    %c0_29 = arith.constant 0 : index
    %65 = vector.load %arg8[%c0_27, %c0_28, %c0_29] : memref<2x18x128xf32, #tpu.memory_space<vmem>>, vector<2x1x128xf32>
    tpu.vector_store %arg8[%c0_27, %c0_28, %c0_29], %64 {strides = array<i32>} : memref<2x18x128xf32, #tpu.memory_space<vmem>>, vector<2x1x128xf32>,
    %c0_30 = arith.constant 0 : index
    %c17 = arith.constant 17 : index
    %c0_31 = arith.constant 0 : index
    %66 = vector.load %arg8[%c0_30, %c17, %c0_31] : memref<2x18x128xf32, #tpu.memory_space<vmem>>, vector<2x1x128xf32>
    tpu.vector_store %arg8[%c0_30, %c17, %c0_31], %64 {strides = array<i32>} : memref<2x18x128xf32, #tpu.memory_space<vmem>>, vector<2x1x128xf32>,
    %67 = vector.shape_cast %63 : vector<32x128xf32> to vector<2x16x128xf32>
    %c0_32 = arith.constant 0 : index
    %c1_33 = arith.constant 1 : index
    %c0_34 = arith.constant 0 : index
    %68 = vector.load %arg8[%c0_32, %c1_33, %c0_34] : memref<2x18x128xf32, #tpu.memory_space<vmem>>, vector<2x16x128xf32>
    tpu.vector_store %arg8[%c0_32, %c1_33, %c0_34], %67 {strides = array<i32>} : memref<2x18x128xf32, #tpu.memory_space<vmem>>, vector<2x16x128xf32>,
    %c0_35 = arith.constant 0 : index
    %c0_36 = arith.constant 0 : index
    %c0_37 = arith.constant 0 : index
    %69 = vector.load %arg8[%c0_35, %c0_36, %c0_37] : memref<2x18x128xf32, #tpu.memory_space<vmem>>, vector<2x18x128xf32>
    %cst_38 = arith.constant 0.000000e+00 : f32
    %70 = vector.broadcast %cst_38 : f32 to vector<32x128xf32>
    %71 = vector.extract_strided_slice %69 {offsets = [0, 0, 0], sizes = [2, 16, 128], strides = [1, 1, 1]} : vector<2x18x128xf32> to vector<2x16x128xf32>
    %72 = vector.shape_cast %71 : vector<2x16x128xf32> to vector<32x128xf32>
    %73 = arith.truncf %72 : vector<32x128xf32> to vector<32x128xbf16>
    %c0_39 = arith.constant 0 : index
    %c0_40 = arith.constant 0 : index
    %c0_41 = arith.constant 0 : index
    %74 = vector.load %arg2[%c0_39, %c0_40, %c0_41] : memref<3x128x128xbf16, #tpu.memory_space<vmem>>, vector<1x128x128xbf16>
    %75 = vector.shape_cast %74 : vector<1x128x128xbf16> to vector<128x128xbf16>
    %cst_42 = arith.constant dense<0.000000e+00> : vector<32x128xf32>
    %76 = tpu.matmul %73, %75, %cst_42 {dimension_numbers = #tpu.dot_dimension_numbers<[1], [0], [0], [1], [0, 0, 1, 1], [], []>} : vector<32x128xbf16>, vector<128x128xbf16>, vector<32x128xf32> -> vector<32x128xf32>
    %77 = arith.addf %70, %76 : vector<32x128xf32>
    %78 = vector.extract_strided_slice %69 {offsets = [0, 1, 0], sizes = [2, 16, 128], strides = [1, 1, 1]} : vector<2x18x128xf32> to vector<2x16x128xf32>
    %79 = vector.shape_cast %78 : vector<2x16x128xf32> to vector<32x128xf32>
    %80 = arith.truncf %79 : vector<32x128xf32> to vector<32x128xbf16>
    %c1_43 = arith.constant 1 : index
    %c0_44 = arith.constant 0 : index
    %c0_45 = arith.constant 0 : index
    %81 = vector.load %arg2[%c1_43, %c0_44, %c0_45] : memref<3x128x128xbf16, #tpu.memory_space<vmem>>, vector<1x128x128xbf16>
    %82 = vector.shape_cast %81 : vector<1x128x128xbf16> to vector<128x128xbf16>
    %cst_46 = arith.constant dense<0.000000e+00> : vector<32x128xf32>
    %83 = tpu.matmul %80, %82, %cst_46 {dimension_numbers = #tpu.dot_dimension_numbers<[1], [0], [0], [1], [0, 0, 1, 1], [], []>} : vector<32x128xbf16>, vector<128x128xbf16>, vector<32x128xf32> -> vector<32x128xf32>
    %84 = arith.addf %77, %83 : vector<32x128xf32>
    %85 = vector.extract_strided_slice %69 {offsets = [0, 2, 0], sizes = [2, 16, 128], strides = [1, 1, 1]} : vector<2x18x128xf32> to vector<2x16x128xf32>
    %86 = vector.shape_cast %85 : vector<2x16x128xf32> to vector<32x128xf32>
    %87 = arith.truncf %86 : vector<32x128xf32> to vector<32x128xbf16>
    %c2_47 = arith.constant 2 : index
    %c0_48 = arith.constant 0 : index
    %c0_49 = arith.constant 0 : index
    %88 = vector.load %arg2[%c2_47, %c0_48, %c0_49] : memref<3x128x128xbf16, #tpu.memory_space<vmem>>, vector<1x128x128xbf16>
    %89 = vector.shape_cast %88 : vector<1x128x128xbf16> to vector<128x128xbf16>
    %cst_50 = arith.constant dense<0.000000e+00> : vector<32x128xf32>
    %90 = tpu.matmul %87, %89, %cst_50 {dimension_numbers = #tpu.dot_dimension_numbers<[1], [0], [0], [1], [0, 0, 1, 1], [], []>} : vector<32x128xbf16>, vector<128x128xbf16>, vector<32x128xf32> -> vector<32x128xf32>
    %91 = arith.addf %84, %90 : vector<32x128xf32>
    %c0_51 = arith.constant 0 : index
    %c0_52 = arith.constant 0 : index
    %92 = vector.load %arg5[%c0_51, %c0_52] : memref<1x128xf32, #tpu.memory_space<vmem>>, vector<1x128xf32>
    %c0_53 = arith.constant 0 : index
    %c0_54 = arith.constant 0 : index
    %93 = vector.load %arg6[%c0_53, %c0_54] : memref<1x128xf32, #tpu.memory_space<vmem>>, vector<1x128xf32>
    %cst_55 = arith.constant dense<0.000000e+00> : vector<128xf32>
    %94 = vector.multi_reduction <add>, %91, %cst_55 [0] : vector<32x128xf32> to vector<128xf32>
    %95 = vector.shape_cast %94 : vector<128xf32> to vector<1x128xf32>
    %96 = arith.mulf %91, %91 : vector<32x128xf32>
    %cst_56 = arith.constant dense<0.000000e+00> : vector<128xf32>
    %97 = vector.multi_reduction <add>, %96, %cst_56 [0] : vector<32x128xf32> to vector<128xf32>
    %98 = vector.shape_cast %97 : vector<128xf32> to vector<1x128xf32>
    %c8_i32_57 = arith.constant 8 : i32
    %99 = tpu.dynamic_rotate %95 by %c8_i32_57 dim 1 : vector<1x128xf32>, i32 -> vector<1x128xf32>
    %100 = arith.addf %95, %99 : vector<1x128xf32>
    %c8_i32_58 = arith.constant 8 : i32
    %101 = tpu.dynamic_rotate %98 by %c8_i32_58 dim 1 : vector<1x128xf32>, i32 -> vector<1x128xf32>
    %102 = arith.addf %98, %101 : vector<1x128xf32>
    %c16_i32_59 = arith.constant 16 : i32
    %103 = tpu.dynamic_rotate %100 by %c16_i32_59 dim 1 : vector<1x128xf32>, i32 -> vector<1x128xf32>
    %104 = arith.addf %100, %103 : vector<1x128xf32>
    %c16_i32_60 = arith.constant 16 : i32
    %105 = tpu.dynamic_rotate %102 by %c16_i32_60 dim 1 : vector<1x128xf32>, i32 -> vector<1x128xf32>
    %106 = arith.addf %102, %105 : vector<1x128xf32>
    %c32_i32_61 = arith.constant 32 : i32
    %107 = tpu.dynamic_rotate %104 by %c32_i32_61 dim 1 : vector<1x128xf32>, i32 -> vector<1x128xf32>
    %108 = arith.addf %104, %107 : vector<1x128xf32>
    %c32_i32_62 = arith.constant 32 : i32
    %109 = tpu.dynamic_rotate %106 by %c32_i32_62 dim 1 : vector<1x128xf32>, i32 -> vector<1x128xf32>
    %110 = arith.addf %106, %109 : vector<1x128xf32>
    %c64_i32_63 = arith.constant 64 : i32
    %111 = tpu.dynamic_rotate %108 by %c64_i32_63 dim 1 : vector<1x128xf32>, i32 -> vector<1x128xf32>
    %112 = arith.addf %108, %111 : vector<1x128xf32>
    %c64_i32_64 = arith.constant 64 : i32
    %113 = tpu.dynamic_rotate %110 by %c64_i32_64 dim 1 : vector<1x128xf32>, i32 -> vector<1x128xf32>
    %114 = arith.addf %110, %113 : vector<1x128xf32>
    %cst_65 = arith.constant 0.001953125 : f32
    %115 = vector.broadcast %cst_65 : f32 to vector<1x128xf32>
    %116 = arith.mulf %112, %115 : vector<1x128xf32>
    %cst_66 = arith.constant 0.001953125 : f32
    %117 = vector.broadcast %cst_66 : f32 to vector<1x128xf32>
    %118 = arith.mulf %114, %117 : vector<1x128xf32>
    %119 = arith.mulf %116, %116 : vector<1x128xf32>
    %120 = arith.subf %118, %119 : vector<1x128xf32>
    %cst_67 = arith.constant 9.99999974E-6 : f32
    %121 = vector.broadcast %cst_67 : f32 to vector<1x128xf32>
    %122 = arith.addf %120, %121 : vector<1x128xf32>
    %123 = math.rsqrt %122 : vector<1x128xf32>
    %124 = arith.mulf %92, %123 : vector<1x128xf32>
    %125 = arith.mulf %116, %124 : vector<1x128xf32>
    %126 = arith.subf %93, %125 : vector<1x128xf32>
    %127 = vector.extract_strided_slice %0 {offsets = [0, 1, 0], sizes = [2, 16, 128], strides = [1, 1, 1]} : vector<2x18x128xf32> to vector<2x16x128xf32>
    %128 = vector.shape_cast %127 : vector<2x16x128xf32> to vector<32x128xf32>
    %129 = vector.broadcast %124 : vector<1x128xf32> to vector<32x128xf32>
    %130 = arith.mulf %91, %129 : vector<32x128xf32>
    %131 = vector.broadcast %126 : vector<1x128xf32> to vector<32x128xf32>
    %132 = arith.addf %130, %131 : vector<32x128xf32>
    %133 = arith.addf %132, %128 : vector<32x128xf32>
    %cst_68 = arith.constant 0.000000e+00 : f32
    %134 = vector.broadcast %cst_68 : f32 to vector<32x128xf32>
    %135 = arith.maximumf %133, %134 : vector<32x128xf32>
    %c0_69 = arith.constant 0 : index
    %c0_70 = arith.constant 0 : index
    %136 = vector.load %arg7[%c0_69, %c0_70] : memref<32x128xf32, #tpu.memory_space<vmem>>, vector<32x128xf32>
    tpu.vector_store %arg7[%c0_69, %c0_70], %135 {strides = array<i32>} : memref<32x128xf32, #tpu.memory_space<vmem>>, vector<32x128xf32>,
    return
  }
}

</mosaic_0001>

<llo_original>
// kernel: tpu_custom_call.1
$region0: #{tpu_custom_call.1}
  #allocation0 [shape = 'u32[]', space=smem, size = 0x4, offset = 0x4, fixed_abs, tag = 'smem constant byte address 0x4 - core index']
  #allocation1 [shape = 'u32[144,128]{1,0:T(1,128)}', space=vmem, size = 0x12000, scoped, tag = 'internal scratch']
  #allocation2 [shape = 'f32[2,18,128]{2,1,0:T(8,128)}', space=vmem, size = 0x6000, scoped, tag = 'scratch operand']
  %s0 = inlined_call_operand.vmem [shape: f32[2,18,128], index: 0, kind: input, shape index: {}]
  %s1 = inlined_call_operand.hbm [shape: bf16[3,128,128], index: 1, kind: input, shape index: {}]
  %s2 = inlined_call_operand.hbm [shape: bf16[3,128,128], index: 2, kind: input, shape index: {}]
  %s3 = inlined_call_operand.vmem [shape: f32[1,128], index: 3, kind: input, shape index: {}]
  %s4 = inlined_call_operand.vmem [shape: f32[1,128], index: 4, kind: input, shape index: {}]
  %s5 = inlined_call_operand.vmem [shape: f32[1,128], index: 5, kind: input, shape index: {}]
  %s6 = inlined_call_operand.vmem [shape: f32[1,128], index: 6, kind: input, shape index: {}]
  %s7 = inlined_call_operand.hbm [shape: f32[32,128], index: 7, kind: output, shape index: {}]
  %s8 = sld [smem:[#allocation0]]
  $region46: #{tpu_custom_call.1} parent=0
    _
  %s10 = ssub.s32 1, %s8
  %s11 = scalar_select 0, %s10, %s8
  $region1: #{tpu_custom_call.1} parent=0
    #allocation3 [shape = 'u8[98304]{0}', space=vmem, size = 0x18000, scoped, tag = 'input window, operand 1, single buffered']
    #allocation4 [shape = 's32[1]{0}', space=sflag, size = 0x4, scoped, tag = 'scoped memory for tpu_custom_call.1']
    #allocation5 [shape = 's32[1]{0}', space=sflag, size = 0x4, scoped, tag = 'scoped memory for tpu_custom_call.1']
    #allocation6 [shape = 'u8[98304]{0}', space=vmem, size = 0x18000, scoped, tag = 'input window, operand 2, single buffered']
    #allocation7 [shape = 's32[1]{0}', space=sflag, size = 0x4, scoped, tag = 'scoped memory for tpu_custom_call.1']
    #allocation8 [shape = 'u8[16384]{0}', space=vmem, size = 0x4000, scoped, tag = 'output window, operand 0, single buffered']
    %12 = vsyncpa [#allocation4], 0
    %13 = vsyncpa [#allocation7], 0
    %14 = vsyncpa [#allocation5], 0
    // Predicated region
    $region2: #{tpu_custom_call.1} parent=1 // pred_check
      _
    $region3: #{tpu_custom_call.1} parent=1 // pred_check_branch
      %16 = sbr.rel (0) target = $region5
    $region4: #{tpu_custom_call.1} parent=1 // pred_region
      _
    $region5: #{tpu_custom_call.1} parent=1 // pred_fallthru
      _
    // Predicated region
    $region6: #{tpu_custom_call.1} parent=1 // pred_check
      _
    $region7: #{tpu_custom_call.1} parent=1 // pred_check_branch
      %18 = sbr.rel (0) target = $region9
    $region8: #{tpu_custom_call.1} parent=1 // pred_region
      %s20 = ssub.s32 3072, 3072
      %21 = vsyncadd [#allocation4], %s20
      %s22 = sshll.u32 [#allocation3], 4
      %s23 = int_to_ptr.vmem [resolvable:$true] %s22
      %28 = dma.hbm_to_vmem [thread:$0]  %s1, 3072, %s23, [#allocation4], 64, 64, 4
    $region9: #{tpu_custom_call.1} parent=1 // pred_fallthru
      _
    // Predicated region
    $region10: #{tpu_custom_call.1} parent=1 // pred_check
      _
    $region11: #{tpu_custom_call.1} parent=1 // pred_check_branch
      %30 = sbr.rel (0) target = $region13
    $region12: #{tpu_custom_call.1} parent=1 // pred_region
      %s32 = ssub.s32 3072, 3072
      %33 = vsyncadd [#allocation7], %s32
      %s34 = sshll.u32 [#allocation6], 4
      %s35 = int_to_ptr.vmem [resolvable:$true] %s34
      %40 = dma.hbm_to_vmem [thread:$0]  %s2, 3072, %s35, [#allocation7], 64, 64, 4
    $region13: #{tpu_custom_call.1} parent=1 // pred_fallthru
      _
    // Predicated region
    $region14: #{tpu_custom_call.1} parent=1 // pred_check
      _
    $region15: #{tpu_custom_call.1} parent=1 // pred_check_branch
      %42 = sbr.rel (0) target = $region17
    $region16: #{tpu_custom_call.1} parent=1 // pred_region
      _
    $region17: #{tpu_custom_call.1} parent=1 // pred_fallthru
      _
    // Predicated region
    $region18: #{tpu_custom_call.1} parent=1 // pred_check
      _
    $region19: #{tpu_custom_call.1} parent=1 // pred_check_branch
      %44 = sbr.rel (0) target = $region21
    $region20: #{tpu_custom_call.1} parent=1 // pred_region
      _
    $region21: #{tpu_custom_call.1} parent=1 // pred_fallthru
      _
    // Predicated region
    $region22: #{tpu_custom_call.1} parent=1 // pred_check
      _
    $region23: #{tpu_custom_call.1} parent=1 // pred_check_branch
      %46 = sbr.rel (0) target = $region25
    $region24: #{tpu_custom_call.1} parent=1 // pred_region
      _
    $region25: #{tpu_custom_call.1} parent=1 // pred_fallthru
      _
    // Predicated region
    $region26: #{tpu_custom_call.1} parent=1 // pred_check
      _
    $region27: #{tpu_custom_call.1} parent=1 // pred_check_branch
      %48 = sbr.rel (0) target = $region29
    $region28: #{tpu_custom_call.1} parent=1 // pred_region
      _
    $region29: #{tpu_custom_call.1} parent=1 // pred_fallthru
      _
    // Predicated region
    $region30: #{tpu_custom_call.1} parent=1 // pred_check
      _
    $region31: #{tpu_custom_call.1} parent=1 // pred_check_branch
      %50 = sbr.rel (0) target = $region33
    $region32: #{tpu_custom_call.1} parent=1 // pred_region
      %51 = dma.done [#allocation4], 3072
    $region33: #{tpu_custom_call.1} parent=1 // pred_fallthru
      _
    // Predicated region
    $region34: #{tpu_custom_call.1} parent=1 // pred_check
      _
    $region35: #{tpu_custom_call.1} parent=1 // pred_check_branch
      %53 = sbr.rel (0) target = $region37
    $region36: #{tpu_custom_call.1} parent=1 // pred_region
      %54 = dma.done [#allocation7], 3072
    $region37: #{tpu_custom_call.1} parent=1 // pred_fallthru
      _
    %v56 = vld [vmem:[%s0] sm:$0xff]
    %v57 = vld [vmem:[%s0 + $0x8] sm:$0xff]
    %v58 = vld [vmem:[%s0 + $0x10] sm:$0x3]
    %v59 = vld [vmem:[%s0 + $0x18] sm:$0xff]
    %v60 = vld [vmem:[%s0 + $0x20] sm:$0xff]
    %v61 = vld [vmem:[%s0 + $0x28] sm:$0x3]
    %v62 = vpack.c.bf16 %v57, %v56
    %v63 = vpack.c.bf16 %v60, %v59
    %v64 = vld [vmem:[#allocation3] sm:$0xf]
    %v65 = vld [vmem:[#allocation3 + $0x4] sm:$0xf]
    %v66 = vld [vmem:[#allocation3 + $0x8] sm:$0xf]
    %v67 = vld [vmem:[#allocation3 + $0xc] sm:$0xf]
    %v68 = vld [vmem:[#allocation3 + $0x10] sm:$0xf]
    %v69 = vld [vmem:[#allocation3 + $0x14] sm:$0xf]
    %v70 = vld [vmem:[#allocation3 + $0x18] sm:$0xf]
    %v71 = vld [vmem:[#allocation3 + $0x1c] sm:$0xf]
    %v72 = vld [vmem:[#allocation3 + $0x20] sm:$0xf]
    %v73 = vld [vmem:[#allocation3 + $0x24] sm:$0xf]
    %v74 = vld [vmem:[#allocation3 + $0x28] sm:$0xf]
    %v75 = vld [vmem:[#allocation3 + $0x2c] sm:$0xf]
    %v76 = vld [vmem:[#allocation3 + $0x30] sm:$0xf]
    %v77 = vld [vmem:[#allocation3 + $0x34] sm:$0xf]
    %v78 = vld [vmem:[#allocation3 + $0x38] sm:$0xf]
    %v79 = vld [vmem:[#allocation3 + $0x3c] sm:$0xf]
    %vm86 = vcmask 1046528
    %v87 = vrot.slane %v56, 1
    %v88 = vrot.slane %v57, 1
    %v89 = vsel %vm86, %v87, %v88
    %v90 = vrot.slane %v58, 1
    %v91 = vsel %vm86, %v88, %v90
    %v92 = vrot.slane %v59, 1
    %v93 = vrot.slane %v60, 1
    %v94 = vsel %vm86, %v92, %v93
    %v95 = vrot.slane %v61, 1
    %v96 = vsel %vm86, %v93, %v95
    %v101 = vpack.c.bf16 %v91, %v89
    %v102 = vpack.c.bf16 %v96, %v94
    %s103 = scalar_lea.vmem [#allocation3], 64
    %v104 = vld [vmem:[%s103] sm:$0xf]
    %v105 = vld [vmem:[%s103 + $0x4] sm:$0xf]
    %v106 = vld [vmem:[%s103 + $0x8] sm:$0xf]
    %v107 = vld [vmem:[%s103 + $0xc] sm:$0xf]
    %v108 = vld [vmem:[%s103 + $0x10] sm:$0xf]
    %v109 = vld [vmem:[%s103 + $0x14] sm:$0xf]
    %v110 = vld [vmem:[%s103 + $0x18] sm:$0xf]
    %v111 = vld [vmem:[%s103 + $0x1c] sm:$0xf]
    %v112 = vld [vmem:[%s103 + $0x20] sm:$0xf]
    %v113 = vld [vmem:[%s103 + $0x24] sm:$0xf]
    %v114 = vld [vmem:[%s103 + $0x28] sm:$0xf]
    %v115 = vld [vmem:[%s103 + $0x2c] sm:$0xf]
    %v116 = vld [vmem:[%s103 + $0x30] sm:$0xf]
    %v117 = vld [vmem:[%s103 + $0x34] sm:$0xf]
    %v118 = vld [vmem:[%s103 + $0x38] sm:$0xf]
    %v119 = vld [vmem:[%s103 + $0x3c] sm:$0xf]
    %v136 = vunpack.c.l.b16 %v104
    %v137 = vunpack.c.l.b16 %v105
    %v138 = vunpack.c.l.b16 %v106
    %v139 = vunpack.c.l.b16 %v107
    %v140 = vunpack.c.l.b16 %v108
    %v141 = vunpack.c.l.b16 %v109
    %v142 = vunpack.c.l.b16 %v110
    %v143 = vunpack.c.l.b16 %v111
    %v144 = vunpack.c.l.b16 %v112
    %v145 = vunpack.c.l.b16 %v113
    %v146 = vunpack.c.l.b16 %v114
    %v147 = vunpack.c.l.b16 %v115
    %v148 = vunpack.c.l.b16 %v116
    %v149 = vunpack.c.l.b16 %v117
    %v150 = vunpack.c.l.b16 %v118
    %v151 = vunpack.c.l.b16 %v119
    %v152 = vpack.c.b16 %v137, %v136
    %v153 = vpack.c.b16 %v139, %v138
    %v154 = vpack.c.b16 %v141, %v140
    %v155 = vpack.c.b16 %v143, %v142
    %v156 = vpack.c.b16 %v145, %v144
    %v157 = vpack.c.b16 %v147, %v146
    %v158 = vpack.c.b16 %v149, %v148
    %v159 = vpack.c.b16 %v151, %v150
    %168 = vmatprep.subr.bf16.mxu0 0
    %169 = vmatpush1.bf16.msra.mxu0 %v159
    %170 = vmatprep.subr.bf16.mxu0 0
    %171 = vmatpush1.bf16.msra.mxu0 %v158
    %172 = vmatprep.subr.bf16.mxu0 0
    %173 = vmatpush1.bf16.msra.mxu0 %v157
    %174 = vmatprep.subr.bf16.mxu0 0
    %175 = vmatpush1.bf16.msra.mxu0 %v156
    %176 = vmatprep.subr.bf16.mxu0 0
    %177 = vmatpush1.bf16.msra.mxu0 %v155
    %178 = vmatprep.subr.bf16.mxu0 0
    %179 = vmatpush1.bf16.msra.mxu0 %v154
    %180 = vmatprep.subr.bf16.mxu0 0
    %181 = vmatpush1.bf16.msra.mxu0 %v153
    %182 = vmatprep.subr.bf16.mxu0 0
    %183 = vmatpush1.bf16.msra.mxu0 %v152
    %184 = vmatprep.subr.bf16.mxu0 0
    %185 = vmatpush2.bf16.msra.mxu0 0
    %186 = vmatprep.subr.bf16.mxu0 0
    %187 = vmatpush2.bf16.msra.mxu0 0
    %188 = vmatprep.subr.bf16.mxu0 0
    %189 = vmatpush2.bf16.msra.mxu0 0
    %190 = vmatprep.subr.bf16.mxu0 0
    %191 = vmatpush2.bf16.msra.mxu0 0
    %192 = vmatprep.subr.bf16.mxu0 0
    %193 = vmatpush2.bf16.msra.mxu0 0
    %194 = vmatprep.subr.bf16.mxu0 0
    %195 = vmatpush2.bf16.msra.mxu0 0
    %196 = vmatprep.subr.bf16.mxu0 0
    %197 = vmatpush2.bf16.msra.mxu0 0
    %198 = vmatprep.subr.bf16.mxu0 0
    %199 = vmatpush2.bf16.msra.mxu0 0
    %200 = vmatprep.mubr.bf16.mxu0 0
    %201 = vmatmul.mubr.bf16.gmra.mxu0 %v101
    %v202 = vpop.f32.mrf.mxu0
    %v203 = vadd.f32 0.0, %v202
    %v204 = vpop.f32.mrf.mxu0
    %v205 = vpop.f32.mrf.mxu0
    %v206 = vadd.f32 0.0, %v205
    %v207 = vpop.f32.mrf.mxu0
    %208 = vmatprep.mubr.bf16.mxu0 0
    %209 = vmatmul.mubr.bf16.gmra.mxu0 %v102
    %v210 = vpop.f32.mrf.mxu0
    %v211 = vadd.f32 0.0, %v210
    %v212 = vpop.f32.mrf.mxu0
    %v213 = vpop.f32.mrf.mxu0
    %v214 = vadd.f32 0.0, %v213
    %v215 = vpop.f32.mrf.mxu0
    %216 = vdwg.mxu0
    %v233 = vunpack.c.l.b16 %v64
    %v234 = vunpack.c.l.b16 %v65
    %v235 = vunpack.c.l.b16 %v66
    %v236 = vunpack.c.l.b16 %v67
    %v237 = vunpack.c.l.b16 %v68
    %v238 = vunpack.c.l.b16 %v69
    %v239 = vunpack.c.l.b16 %v70
    %v240 = vunpack.c.l.b16 %v71
    %v241 = vunpack.c.l.b16 %v72
    %v242 = vunpack.c.l.b16 %v73
    %v243 = vunpack.c.l.b16 %v74
    %v244 = vunpack.c.l.b16 %v75
    %v245 = vunpack.c.l.b16 %v76
    %v246 = vunpack.c.l.b16 %v77
    %v247 = vunpack.c.l.b16 %v78
    %v248 = vunpack.c.l.b16 %v79
    %v249 = vpack.c.b16 %v234, %v233
    %v250 = vpack.c.b16 %v236, %v235
    %v251 = vpack.c.b16 %v238, %v237
    %v252 = vpack.c.b16 %v240, %v239
    %v253 = vpack.c.b16 %v242, %v241
    %v254 = vpack.c.b16 %v244, %v243
    %v255 = vpack.c.b16 %v246, %v245
    %v256 = vpack.c.b16 %v248, %v247
    %265 = vmatprep.subr.bf16.mxu0 0
    %266 = vmatpush1.bf16.msra.mxu0 %v256
    %267 = vmatprep.subr.bf16.mxu0 0
    %268 = vmatpush1.bf16.msra.mxu0 %v255
    %269 = vmatprep.subr.bf16.mxu0 0
    %270 = vmatpush1.bf16.msra.mxu0 %v254
    %271 = vmatprep.subr.bf16.mxu0 0
    %272 = vmatpush1.bf16.msra.mxu0 %v253
    %273 = vmatprep.subr.bf16.mxu0 0
    %274 = vmatpush1.bf16.msra.mxu0 %v252
    %275 = vmatprep.subr.bf16.mxu0 0
    %276 = vmatpush1.bf16.msra.mxu0 %v251
    %277 = vmatprep.subr.bf16.mxu0 0
    %278 = vmatpush1.bf16.msra.mxu0 %v250
    %279 = vmatprep.subr.bf16.mxu0 0
    %280 = vmatpush1.bf16.msra.mxu0 %v249
    %281 = vmatprep.subr.bf16.mxu0 0
    %282 = vmatpush2.bf16.msra.mxu0 0
    %283 = vmatprep.subr.bf16.mxu0 0
    %284 = vmatpush2.bf16.msra.mxu0 0
    %285 = vmatprep.subr.bf16.mxu0 0
    %286 = vmatpush2.bf16.msra.mxu0 0
    %287 = vmatprep.subr.bf16.mxu0 0
    %288 = vmatpush2.bf16.msra.mxu0 0
    %289 = vmatprep.subr.bf16.mxu0 0
    %290 = vmatpush2.bf16.msra.mxu0 0
    %291 = vmatprep.subr.bf16.mxu0 0
    %292 = vmatpush2.bf16.msra.mxu0 0
    %293 = vmatprep.subr.bf16.mxu0 0
    %294 = vmatpush2.bf16.msra.mxu0 0
    %295 = vmatprep.subr.bf16.mxu0 0
    %296 = vmatpush2.bf16.msra.mxu0 0
    %297 = vmatprep.mubr.bf16.mxu0 0
    %298 = vmatmul.mubr.bf16.gmra.mxu0 %v62
    %v299 = vpop.f32.mrf.mxu0
    %v300 = vadd.f32 %v203, %v299
    %v301 = vpop.f32.mrf.mxu0
    %v302 = vpop.f32.mrf.mxu0
    %v303 = vadd.f32 %v206, %v302
    %v304 = vpop.f32.mrf.mxu0
    %305 = vmatprep.mubr.bf16.mxu0 0
    %306 = vmatmul.mubr.bf16.gmra.mxu0 %v63
    %v307 = vpop.f32.mrf.mxu0
    %v308 = vadd.f32 %v211, %v307
    %v309 = vpop.f32.mrf.mxu0
    %v310 = vpop.f32.mrf.mxu0
    %v311 = vadd.f32 %v214, %v310
    %v312 = vpop.f32.mrf.mxu0
    %313 = vdwg.mxu0
    %vm314 = vcmask 1045504
    %v315 = vrot.slane %v56, 2
    %v316 = vrot.slane %v57, 2
    %v317 = vsel %vm314, %v315, %v316
    %v318 = vrot.slane %v58, 2
    %v319 = vsel %vm314, %v316, %v318
    %v320 = vrot.slane %v59, 2
    %v321 = vrot.slane %v60, 2
    %v322 = vsel %vm314, %v320, %v321
    %v323 = vrot.slane %v61, 2
    %v324 = vsel %vm314, %v321, %v323
    %v329 = vpack.c.bf16 %v319, %v317
    %v330 = vpack.c.bf16 %v324, %v322
    %s331 = scalar_lea.vmem [#allocation3], 128
    %v332 = vld [vmem:[%s331] sm:$0xf]
    %v333 = vld [vmem:[%s331 + $0x4] sm:$0xf]
    %v334 = vld [vmem:[%s331 + $0x8] sm:$0xf]
    %v335 = vld [vmem:[%s331 + $0xc] sm:$0xf]
    %v336 = vld [vmem:[%s331 + $0x10] sm:$0xf]
    %v337 = vld [vmem:[%s331 + $0x14] sm:$0xf]
    %v338 = vld [vmem:[%s331 + $0x18] sm:$0xf]
    %v339 = vld [vmem:[%s331 + $0x1c] sm:$0xf]
    %v340 = vld [vmem:[%s331 + $0x20] sm:$0xf]
    %v341 = vld [vmem:[%s331 + $0x24] sm:$0xf]
    %v342 = vld [vmem:[%s331 + $0x28] sm:$0xf]
    %v343 = vld [vmem:[%s331 + $0x2c] sm:$0xf]
    %v344 = vld [vmem:[%s331 + $0x30] sm:$0xf]
    %v345 = vld [vmem:[%s331 + $0x34] sm:$0xf]
    %v346 = vld [vmem:[%s331 + $0x38] sm:$0xf]
    %v347 = vld [vmem:[%s331 + $0x3c] sm:$0xf]
    %v364 = vunpack.c.l.b16 %v332
    %v365 = vunpack.c.l.b16 %v333
    %v366 = vunpack.c.l.b16 %v334
    %v367 = vunpack.c.l.b16 %v335
    %v368 = vunpack.c.l.b16 %v336
    %v369 = vunpack.c.l.b16 %v337
    %v370 = vunpack.c.l.b16 %v338
    %v371 = vunpack.c.l.b16 %v339
    %v372 = vunpack.c.l.b16 %v340
    %v373 = vunpack.c.l.b16 %v341
    %v374 = vunpack.c.l.b16 %v342
    %v375 = vunpack.c.l.b16 %v343
    %v376 = vunpack.c.l.b16 %v344
    %v377 = vunpack.c.l.b16 %v345
    %v378 = vunpack.c.l.b16 %v346
    %v379 = vunpack.c.l.b16 %v347
    %v380 = vpack.c.b16 %v365, %v364
    %v381 = vpack.c.b16 %v367, %v366
    %v382 = vpack.c.b16 %v369, %v368
    %v383 = vpack.c.b16 %v371, %v370
    %v384 = vpack.c.b16 %v373, %v372
    %v385 = vpack.c.b16 %v375, %v374
    %v386 = vpack.c.b16 %v377, %v376
    %v387 = vpack.c.b16 %v379, %v378
    %396 = vmatprep.subr.bf16.mxu0 0
    %397 = vmatpush1.bf16.msra.mxu0 %v387
    %398 = vmatprep.subr.bf16.mxu0 0
    %399 = vmatpush1.bf16.msra.mxu0 %v386
    %400 = vmatprep.subr.bf16.mxu0 0
    %401 = vmatpush1.bf16.msra.mxu0 %v385
    %402 = vmatprep.subr.bf16.mxu0 0
    %403 = vmatpush1.bf16.msra.mxu0 %v384
    %404 = vmatprep.subr.bf16.mxu0 0
    %405 = vmatpush1.bf16.msra.mxu0 %v383
    %406 = vmatprep.subr.bf16.mxu0 0
    %407 = vmatpush1.bf16.msra.mxu0 %v382
    %408 = vmatprep.subr.bf16.mxu0 0
    %409 = vmatpush1.bf16.msra.mxu0 %v381
    %410 = vmatprep.subr.bf16.mxu0 0
    %411 = vmatpush1.bf16.msra.mxu0 %v380
    %412 = vmatprep.subr.bf16.mxu0 0
    %413 = vmatpush2.bf16.msra.mxu0 0
    %414 = vmatprep.subr.bf16.mxu0 0
    %415 = vmatpush2.bf16.msra.mxu0 0
    %416 = vmatprep.subr.bf16.mxu0 0
    %417 = vmatpush2.bf16.msra.mxu0 0
    %418 = vmatprep.subr.bf16.mxu0 0
    %419 = vmatpush2.bf16.msra.mxu0 0
    %420 = vmatprep.subr.bf16.mxu0 0
    %421 = vmatpush2.bf16.msra.mxu0 0
    %422 = vmatprep.subr.bf16.mxu0 0
    %423 = vmatpush2.bf16.msra.mxu0 0
    %424 = vmatprep.subr.bf16.mxu0 0
    %425 = vmatpush2.bf16.msra.mxu0 0
    %426 = vmatprep.subr.bf16.mxu0 0
    %427 = vmatpush2.bf16.msra.mxu0 0
    %428 = vmatprep.mubr.bf16.mxu0 0
    %429 = vmatmul.mubr.bf16.gmra.mxu0 %v329
    %v430 = vpop.f32.mrf.mxu0
    %v431 = vadd.f32 0.0, %v430
    %v432 = vpop.f32.mrf.mxu0
    %v433 = vpop.f32.mrf.mxu0
    %v434 = vadd.f32 0.0, %v433
    %v435 = vpop.f32.mrf.mxu0
    %436 = vmatprep.mubr.bf16.mxu0 0
    %437 = vmatmul.mubr.bf16.gmra.mxu0 %v330
    %v438 = vpop.f32.mrf.mxu0
    %v439 = vadd.f32 0.0, %v438
    %v440 = vpop.f32.mrf.mxu0
    %v441 = vpop.f32.mrf.mxu0
    %v442 = vadd.f32 0.0, %v441
    %v443 = vpop.f32.mrf.mxu0
    %444 = vdwg.mxu0
    %v445 = vadd.f32 %v300, %v431
    %v446 = vadd.f32 %v303, %v434
    %v447 = vadd.f32 %v308, %v439
    %v448 = vadd.f32 %v311, %v442
    %v449 = vld [vmem:[%s3] sm:$0x1]
    %v450 = vld [vmem:[%s4] sm:$0x1]
    %v451 = vadd.f32 %v445, %v446
    %v452 = vadd.f32 %v451, %v447
    %v453 = vadd.f32 %v452, %v448
    %v454 = vrot.slane %v453, 4
    %v455 = vadd.f32 %v453, %v454
    %v456 = vrot.slane %v455, 2
    %v457 = vadd.f32 %v455, %v456
    %v458 = vrot.slane %v457, 1
    %v459 = vadd.f32 %v457, %v458
    %v460 = vmul.f32 %v445, %v445
    %v461 = vmul.f32 %v446, %v446
    %v462 = vmul.f32 %v447, %v447
    %v463 = vmul.f32 %v448, %v448
    %v464 = vadd.f32 %v460, %v461
    %v465 = vadd.f32 %v464, %v462
    %v466 = vadd.f32 %v465, %v463
    %v467 = vrot.slane %v466, 4
    %v468 = vadd.f32 %v466, %v467
    %v469 = vrot.slane %v468, 2
    %v470 = vadd.f32 %v468, %v469
    %v471 = vrot.slane %v470, 1
    %v472 = vadd.f32 %v470, %v471
    %473 = vrot.lane.b32.xlu0 %v459, 8
    %v474 = vpop.permute.xlu0 %473
    %v475 = vadd.f32 %v459, %v474
    %476 = vrot.lane.b32.xlu0 %v472, 8
    %v477 = vpop.permute.xlu0 %476
    %v478 = vadd.f32 %v472, %v477
    %479 = vrot.lane.b32.xlu0 %v475, 16
    %v480 = vpop.permute.xlu0 %479
    %v481 = vadd.f32 %v475, %v480
    %482 = vrot.lane.b32.xlu0 %v478, 16
    %v483 = vpop.permute.xlu0 %482
    %v484 = vadd.f32 %v478, %v483
    %485 = vrot.lane.b32.xlu0 %v481, 32
    %v486 = vpop.permute.xlu0 %485
    %v487 = vadd.f32 %v481, %v486
    %488 = vrot.lane.b32.xlu0 %v484, 32
    %v489 = vpop.permute.xlu0 %488
    %v490 = vadd.f32 %v484, %v489
    %491 = vrot.lane.b32.xlu0 %v487, 64
    %v492 = vpop.permute.xlu0 %491
    %v493 = vadd.f32 %v487, %v492
    %494 = vrot.lane.b32.xlu0 %v490, 64
    %v495 = vpop.permute.xlu0 %494
    %v496 = vadd.f32 %v490, %v495
    %v497 = vmul.f32 %v493, 0.001953125
    %v498 = vmul.f32 %v496, 0.001953125
    %v499 = vmul.f32 %v497, %v497
    %v500 = vsub.f32 %v498, %v499
    %v501 = vadd.f32 %v500, 1e-05
    %v502 = vrsqrt.pop %v501
    %v503 = vmul.f32 %v449, %v502
    %v504 = vmul.f32 %v497, %v503
    %v505 = vsub.f32 %v450, %v504
    %v507 = vlaneseq
    %v508 = vshrl.u32 %v507, 7
    %v509 = vsub.s32 0, %v508
    %v510 = vrot.slane %v503, %v509
    %v512 = vmul.f32 %v445, %v510
    %v513 = vmul.f32 %v446, %v510
    %v514 = vmul.f32 %v447, %v510
    %v515 = vmul.f32 %v448, %v510
    %v517 = vlaneseq
    %v518 = vshrl.u32 %v517, 7
    %v519 = vsub.s32 0, %v518
    %v520 = vrot.slane %v505, %v519
    %v522 = vadd.f32 %v512, %v520
    %v523 = vadd.f32 %v513, %v520
    %v524 = vadd.f32 %v514, %v520
    %v525 = vadd.f32 %v515, %v520
    %v526 = vmax.f32 %v522, 0.0
    %v527 = vmax.f32 %v523, 0.0
    %v528 = vmax.f32 %v524, 0.0
    %v529 = vmax.f32 %v525, 0.0
    %530 = vst [vmem:[#allocation2] sm:$0x1] 0.0
    %531 = vst [vmem:[#allocation2 + $0x18] sm:$0x1] 0.0
    %532 = vst [vmem:[#allocation2 + $0x11] sm:$0x1] 0.0
    %533 = vst [vmem:[#allocation2 + $0x29] sm:$0x1] 0.0
    %534 = vst [vmem:[#allocation2 + $0x1] sm:$0xff] %v526
    %535 = vst [vmem:[#allocation2 + $0x9] sm:$0xff] %v527
    %536 = vst [vmem:[#allocation2 + $0x19] sm:$0xff] %v528
    %537 = vst [vmem:[#allocation2 + $0x21] sm:$0xff] %v529
    %v538 = vld [vmem:[#allocation2] sm:$0xff]
    %v539 = vld [vmem:[#allocation2 + $0x8] sm:$0xff]
    %v540 = vld [vmem:[#allocation2 + $0x10] sm:$0x3]
    %v541 = vld [vmem:[#allocation2 + $0x18] sm:$0xff]
    %v542 = vld [vmem:[#allocation2 + $0x20] sm:$0xff]
    %v543 = vld [vmem:[#allocation2 + $0x28] sm:$0x3]
    %v544 = vpack.c.bf16 %v539, %v538
    %v545 = vpack.c.bf16 %v542, %v541
    %v546 = vld [vmem:[#allocation6] sm:$0xf]
    %v547 = vld [vmem:[#allocation6 + $0x4] sm:$0xf]
    %v548 = vld [vmem:[#allocation6 + $0x8] sm:$0xf]
    %v549 = vld [vmem:[#allocation6 + $0xc] sm:$0xf]
    %v550 = vld [vmem:[#allocation6 + $0x10] sm:$0xf]
    %v551 = vld [vmem:[#allocation6 + $0x14] sm:$0xf]
    %v552 = vld [vmem:[#allocation6 + $0x18] sm:$0xf]
    %v553 = vld [vmem:[#allocation6 + $0x1c] sm:$0xf]
    %v554 = vld [vmem:[#allocation6 + $0x20] sm:$0xf]
    %v555 = vld [vmem:[#allocation6 + $0x24] sm:$0xf]
    %v556 = vld [vmem:[#allocation6 + $0x28] sm:$0xf]
    %v557 = vld [vmem:[#allocation6 + $0x2c] sm:$0xf]
    %v558 = vld [vmem:[#allocation6 + $0x30] sm:$0xf]
    %v559 = vld [vmem:[#allocation6 + $0x34] sm:$0xf]
    %v560 = vld [vmem:[#allocation6 + $0x38] sm:$0xf]
    %v561 = vld [vmem:[#allocation6 + $0x3c] sm:$0xf]
    %v568 = vrot.slane %v538, 1
    %v569 = vrot.slane %v539, 1
    %v570 = vsel %vm86, %v568, %v569
    %v571 = vrot.slane %v540, 1
    %v572 = vsel %vm86, %v569, %v571
    %v573 = vrot.slane %v541, 1
    %v574 = vrot.slane %v542, 1
    %v575 = vsel %vm86, %v573, %v574
    %v576 = vrot.slane %v543, 1
    %v577 = vsel %vm86, %v574, %v576
    %v582 = vpack.c.bf16 %v572, %v570
    %v583 = vpack.c.bf16 %v577, %v575
    %s584 = scalar_lea.vmem [#allocation6], 64
    %v585 = vld [vmem:[%s584] sm:$0xf]
    %v586 = vld [vmem:[%s584 + $0x4] sm:$0xf]
    %v587 = vld [vmem:[%s584 + $0x8] sm:$0xf]
    %v588 = vld [vmem:[%s584 + $0xc] sm:$0xf]
    %v589 = vld [vmem:[%s584 + $0x10] sm:$0xf]
    %v590 = vld [vmem:[%s584 + $0x14] sm:$0xf]
    %v591 = vld [vmem:[%s584 + $0x18] sm:$0xf]
    %v592 = vld [vmem:[%s584 + $0x1c] sm:$0xf]
    %v593 = vld [vmem:[%s584 + $0x20] sm:$0xf]
    %v594 = vld [vmem:[%s584 + $0x24] sm:$0xf]
    %v595 = vld [vmem:[%s584 + $0x28] sm:$0xf]
    %v596 = vld [vmem:[%s584 + $0x2c] sm:$0xf]
    %v597 = vld [vmem:[%s584 + $0x30] sm:$0xf]
    %v598 = vld [vmem:[%s584 + $0x34] sm:$0xf]
    %v599 = vld [vmem:[%s584 + $0x38] sm:$0xf]
    %v600 = vld [vmem:[%s584 + $0x3c] sm:$0xf]
    %v617 = vunpack.c.l.b16 %v585
    %v618 = vunpack.c.l.b16 %v586
    %v619 = vunpack.c.l.b16 %v587
    %v620 = vunpack.c.l.b16 %v588
    %v621 = vunpack.c.l.b16 %v589
    %v622 = vunpack.c.l.b16 %v590
    %v623 = vunpack.c.l.b16 %v591
    %v624 = vunpack.c.l.b16 %v592
    %v625 = vunpack.c.l.b16 %v593
    %v626 = vunpack.c.l.b16 %v594
    %v627 = vunpack.c.l.b16 %v595
    %v628 = vunpack.c.l.b16 %v596
    %v629 = vunpack.c.l.b16 %v597
    %v630 = vunpack.c.l.b16 %v598
    %v631 = vunpack.c.l.b16 %v599
    %v632 = vunpack.c.l.b16 %v600
    %v633 = vpack.c.b16 %v618, %v617
    %v634 = vpack.c.b16 %v620, %v619
    %v635 = vpack.c.b16 %v622, %v621
    %v636 = vpack.c.b16 %v624, %v623
    %v637 = vpack.c.b16 %v626, %v625
    %v638 = vpack.c.b16 %v628, %v627
    %v639 = vpack.c.b16 %v630, %v629
    %v640 = vpack.c.b16 %v632, %v631
    %649 = vmatprep.subr.bf16.mxu0 0
    %650 = vmatpush1.bf16.msra.mxu0 %v640
    %651 = vmatprep.subr.bf16.mxu0 0
    %652 = vmatpush1.bf16.msra.mxu0 %v639
    %653 = vmatprep.subr.bf16.mxu0 0
    %654 = vmatpush1.bf16.msra.mxu0 %v638
    %655 = vmatprep.subr.bf16.mxu0 0
    %656 = vmatpush1.bf16.msra.mxu0 %v637
    %657 = vmatprep.subr.bf16.mxu0 0
    %658 = vmatpush1.bf16.msra.mxu0 %v636
    %659 = vmatprep.subr.bf16.mxu0 0
    %660 = vmatpush1.bf16.msra.mxu0 %v635
    %661 = vmatprep.subr.bf16.mxu0 0
    %662 = vmatpush1.bf16.msra.mxu0 %v634
    %663 = vmatprep.subr.bf16.mxu0 0
    %664 = vmatpush1.bf16.msra.mxu0 %v633
    %665 = vmatprep.subr.bf16.mxu0 0
    %666 = vmatpush2.bf16.msra.mxu0 0
    %667 = vmatprep.subr.bf16.mxu0 0
    %668 = vmatpush2.bf16.msra.mxu0 0
    %669 = vmatprep.subr.bf16.mxu0 0
    %670 = vmatpush2.bf16.msra.mxu0 0
    %671 = vmatprep.subr.bf16.mxu0 0
    %672 = vmatpush2.bf16.msra.mxu0 0
    %673 = vmatprep.subr.bf16.mxu0 0
    %674 = vmatpush2.bf16.msra.mxu0 0
    %675 = vmatprep.subr.bf16.mxu0 0
    %676 = vmatpush2.bf16.msra.mxu0 0
    %677 = vmatprep.subr.bf16.mxu0 0
    %678 = vmatpush2.bf16.msra.mxu0 0
    %679 = vmatprep.subr.bf16.mxu0 0
    %680 = vmatpush2.bf16.msra.mxu0 0
    %681 = vmatprep.mubr.bf16.mxu0 0
    %682 = vmatmul.mubr.bf16.gmra.mxu0 %v582
    %v683 = vpop.f32.mrf.mxu0
    %v684 = vadd.f32 0.0, %v683
    %v685 = vpop.f32.mrf.mxu0
    %v686 = vpop.f32.mrf.mxu0
    %v687 = vadd.f32 0.0, %v686
    %v688 = vpop.f32.mrf.mxu0
    %689 = vmatprep.mubr.bf16.mxu0 0
    %690 = vmatmul.mubr.bf16.gmra.mxu0 %v583
    %v691 = vpop.f32.mrf.mxu0
    %v692 = vadd.f32 0.0, %v691
    %v693 = vpop.f32.mrf.mxu0
    %v694 = vpop.f32.mrf.mxu0
    %v695 = vadd.f32 0.0, %v694
    %v696 = vpop.f32.mrf.mxu0
    %697 = vdwg.mxu0
    %v714 = vunpack.c.l.b16 %v546
    %v715 = vunpack.c.l.b16 %v547
    %v716 = vunpack.c.l.b16 %v548
    %v717 = vunpack.c.l.b16 %v549
    %v718 = vunpack.c.l.b16 %v550
    %v719 = vunpack.c.l.b16 %v551
    %v720 = vunpack.c.l.b16 %v552
    %v721 = vunpack.c.l.b16 %v553
    %v722 = vunpack.c.l.b16 %v554
    %v723 = vunpack.c.l.b16 %v555
    %v724 = vunpack.c.l.b16 %v556
    %v725 = vunpack.c.l.b16 %v557
    %v726 = vunpack.c.l.b16 %v558
    %v727 = vunpack.c.l.b16 %v559
    %v728 = vunpack.c.l.b16 %v560
    %v729 = vunpack.c.l.b16 %v561
    %v730 = vpack.c.b16 %v715, %v714
    %v731 = vpack.c.b16 %v717, %v716
    %v732 = vpack.c.b16 %v719, %v718
    %v733 = vpack.c.b16 %v721, %v720
    %v734 = vpack.c.b16 %v723, %v722
    %v735 = vpack.c.b16 %v725, %v724
    %v736 = vpack.c.b16 %v727, %v726
    %v737 = vpack.c.b16 %v729, %v728
    %746 = vmatprep.subr.bf16.mxu0 0
    %747 = vmatpush1.bf16.msra.mxu0 %v737
    %748 = vmatprep.subr.bf16.mxu0 0
    %749 = vmatpush1.bf16.msra.mxu0 %v736
    %750 = vmatprep.subr.bf16.mxu0 0
    %751 = vmatpush1.bf16.msra.mxu0 %v735
    %752 = vmatprep.subr.bf16.mxu0 0
    %753 = vmatpush1.bf16.msra.mxu0 %v734
    %754 = vmatprep.subr.bf16.mxu0 0
    %755 = vmatpush1.bf16.msra.mxu0 %v733
    %756 = vmatprep.subr.bf16.mxu0 0
    %757 = vmatpush1.bf16.msra.mxu0 %v732
    %758 = vmatprep.subr.bf16.mxu0 0
    %759 = vmatpush1.bf16.msra.mxu0 %v731
    %760 = vmatprep.subr.bf16.mxu0 0
    %761 = vmatpush1.bf16.msra.mxu0 %v730
    %762 = vmatprep.subr.bf16.mxu0 0
    %763 = vmatpush2.bf16.msra.mxu0 0
    %764 = vmatprep.subr.bf16.mxu0 0
    %765 = vmatpush2.bf16.msra.mxu0 0
    %766 = vmatprep.subr.bf16.mxu0 0
    %767 = vmatpush2.bf16.msra.mxu0 0
    %768 = vmatprep.subr.bf16.mxu0 0
    %769 = vmatpush2.bf16.msra.mxu0 0
    %770 = vmatprep.subr.bf16.mxu0 0
    %771 = vmatpush2.bf16.msra.mxu0 0
    %772 = vmatprep.subr.bf16.mxu0 0
    %773 = vmatpush2.bf16.msra.mxu0 0
    %774 = vmatprep.subr.bf16.mxu0 0
    %775 = vmatpush2.bf16.msra.mxu0 0
    %776 = vmatprep.subr.bf16.mxu0 0
    %777 = vmatpush2.bf16.msra.mxu0 0
    %778 = vmatprep.mubr.bf16.mxu0 0
    %779 = vmatmul.mubr.bf16.gmra.mxu0 %v544
    %v780 = vpop.f32.mrf.mxu0
    %v781 = vadd.f32 %v684, %v780
    %v782 = vpop.f32.mrf.mxu0
    %v783 = vpop.f32.mrf.mxu0
    %v784 = vadd.f32 %v687, %v783
    %v785 = vpop.f32.mrf.mxu0
    %786 = vmatprep.mubr.bf16.mxu0 0
    %787 = vmatmul.mubr.bf16.gmra.mxu0 %v545
    %v788 = vpop.f32.mrf.mxu0
    %v789 = vadd.f32 %v692, %v788
    %v790 = vpop.f32.mrf.mxu0
    %v791 = vpop.f32.mrf.mxu0
    %v792 = vadd.f32 %v695, %v791
    %v793 = vpop.f32.mrf.mxu0
    %794 = vdwg.mxu0
    %v795 = vrot.slane %v538, 2
    %v796 = vrot.slane %v539, 2
    %v797 = vsel %vm314, %v795, %v796
    %v798 = vrot.slane %v540, 2
    %v799 = vsel %vm314, %v796, %v798
    %v800 = vrot.slane %v541, 2
    %v801 = vrot.slane %v542, 2
    %v802 = vsel %vm314, %v800, %v801
    %v803 = vrot.slane %v543, 2
    %v804 = vsel %vm314, %v801, %v803
    %v809 = vpack.c.bf16 %v799, %v797
    %v810 = vpack.c.bf16 %v804, %v802
    %s811 = scalar_lea.vmem [#allocation6], 128
    %v812 = vld [vmem:[%s811] sm:$0xf]
    %v813 = vld [vmem:[%s811 + $0x4] sm:$0xf]
    %v814 = vld [vmem:[%s811 + $0x8] sm:$0xf]
    %v815 = vld [vmem:[%s811 + $0xc] sm:$0xf]
    %v816 = vld [vmem:[%s811 + $0x10] sm:$0xf]
    %v817 = vld [vmem:[%s811 + $0x14] sm:$0xf]
    %v818 = vld [vmem:[%s811 + $0x18] sm:$0xf]
    %v819 = vld [vmem:[%s811 + $0x1c] sm:$0xf]
    %v820 = vld [vmem:[%s811 + $0x20] sm:$0xf]
    %v821 = vld [vmem:[%s811 + $0x24] sm:$0xf]
    %v822 = vld [vmem:[%s811 + $0x28] sm:$0xf]
    %v823 = vld [vmem:[%s811 + $0x2c] sm:$0xf]
    %v824 = vld [vmem:[%s811 + $0x30] sm:$0xf]
    %v825 = vld [vmem:[%s811 + $0x34] sm:$0xf]
    %v826 = vld [vmem:[%s811 + $0x38] sm:$0xf]
    %v827 = vld [vmem:[%s811 + $0x3c] sm:$0xf]
    %v844 = vunpack.c.l.b16 %v812
    %v845 = vunpack.c.l.b16 %v813
    %v846 = vunpack.c.l.b16 %v814
    %v847 = vunpack.c.l.b16 %v815
    %v848 = vunpack.c.l.b16 %v816
    %v849 = vunpack.c.l.b16 %v817
    %v850 = vunpack.c.l.b16 %v818
    %v851 = vunpack.c.l.b16 %v819
    %v852 = vunpack.c.l.b16 %v820
    %v853 = vunpack.c.l.b16 %v821
    %v854 = vunpack.c.l.b16 %v822
    %v855 = vunpack.c.l.b16 %v823
    %v856 = vunpack.c.l.b16 %v824
    %v857 = vunpack.c.l.b16 %v825
    %v858 = vunpack.c.l.b16 %v826
    %v859 = vunpack.c.l.b16 %v827
    %v860 = vpack.c.b16 %v845, %v844
    %v861 = vpack.c.b16 %v847, %v846
    %v862 = vpack.c.b16 %v849, %v848
    %v863 = vpack.c.b16 %v851, %v850
    %v864 = vpack.c.b16 %v853, %v852
    %v865 = vpack.c.b16 %v855, %v854
    %v866 = vpack.c.b16 %v857, %v856
    %v867 = vpack.c.b16 %v859, %v858
    %876 = vmatprep.subr.bf16.mxu0 0
    %877 = vmatpush1.bf16.msra.mxu0 %v867
    %878 = vmatprep.subr.bf16.mxu0 0
    %879 = vmatpush1.bf16.msra.mxu0 %v866
    %880 = vmatprep.subr.bf16.mxu0 0
    %881 = vmatpush1.bf16.msra.mxu0 %v865
    %882 = vmatprep.subr.bf16.mxu0 0
    %883 = vmatpush1.bf16.msra.mxu0 %v864
    %884 = vmatprep.subr.bf16.mxu0 0
    %885 = vmatpush1.bf16.msra.mxu0 %v863
    %886 = vmatprep.subr.bf16.mxu0 0
    %887 = vmatpush1.bf16.msra.mxu0 %v862
    %888 = vmatprep.subr.bf16.mxu0 0
    %889 = vmatpush1.bf16.msra.mxu0 %v861
    %890 = vmatprep.subr.bf16.mxu0 0
    %891 = vmatpush1.bf16.msra.mxu0 %v860
    %892 = vmatprep.subr.bf16.mxu0 0
    %893 = vmatpush2.bf16.msra.mxu0 0
    %894 = vmatprep.subr.bf16.mxu0 0
    %895 = vmatpush2.bf16.msra.mxu0 0
    %896 = vmatprep.subr.bf16.mxu0 0
    %897 = vmatpush2.bf16.msra.mxu0 0
    %898 = vmatprep.subr.bf16.mxu0 0
    %899 = vmatpush2.bf16.msra.mxu0 0
    %900 = vmatprep.subr.bf16.mxu0 0
    %901 = vmatpush2.bf16.msra.mxu0 0
    %902 = vmatprep.subr.bf16.mxu0 0
    %903 = vmatpush2.bf16.msra.mxu0 0
    %904 = vmatprep.subr.bf16.mxu0 0
    %905 = vmatpush2.bf16.msra.mxu0 0
    %906 = vmatprep.subr.bf16.mxu0 0
    %907 = vmatpush2.bf16.msra.mxu0 0
    %908 = vmatprep.mubr.bf16.mxu0 0
    %909 = vmatmul.mubr.bf16.gmra.mxu0 %v809
    %v910 = vpop.f32.mrf.mxu0
    %v911 = vadd.f32 0.0, %v910
    %v912 = vpop.f32.mrf.mxu0
    %v913 = vpop.f32.mrf.mxu0
    %v914 = vadd.f32 0.0, %v913
    %v915 = vpop.f32.mrf.mxu0
    %916 = vmatprep.mubr.bf16.mxu0 0
    %917 = vmatmul.mubr.bf16.gmra.mxu0 %v810
    %v918 = vpop.f32.mrf.mxu0
    %v919 = vadd.f32 0.0, %v918
    %v920 = vpop.f32.mrf.mxu0
    %v921 = vpop.f32.mrf.mxu0
    %v922 = vadd.f32 0.0, %v921
    %v923 = vpop.f32.mrf.mxu0
    %924 = vdwg.mxu0
    %v925 = vadd.f32 %v781, %v911
    %v926 = vadd.f32 %v784, %v914
    %v927 = vadd.f32 %v789, %v919
    %v928 = vadd.f32 %v792, %v922
    %v929 = vld [vmem:[%s5] sm:$0x1]
    %v930 = vld [vmem:[%s6] sm:$0x1]
    %v931 = vadd.f32 %v925, %v926
    %v932 = vadd.f32 %v931, %v927
    %v933 = vadd.f32 %v932, %v928
    %v934 = vrot.slane %v933, 4
    %v935 = vadd.f32 %v933, %v934
    %v936 = vrot.slane %v935, 2
    %v937 = vadd.f32 %v935, %v936
    %v938 = vrot.slane %v937, 1
    %v939 = vadd.f32 %v937, %v938
    %v940 = vmul.f32 %v925, %v925
    %v941 = vmul.f32 %v926, %v926
    %v942 = vmul.f32 %v927, %v927
    %v943 = vmul.f32 %v928, %v928
    %v944 = vadd.f32 %v940, %v941
    %v945 = vadd.f32 %v944, %v942
    %v946 = vadd.f32 %v945, %v943
    %v947 = vrot.slane %v946, 4
    %v948 = vadd.f32 %v946, %v947
    %v949 = vrot.slane %v948, 2
    %v950 = vadd.f32 %v948, %v949
    %v951 = vrot.slane %v950, 1
    %v952 = vadd.f32 %v950, %v951
    %953 = vrot.lane.b32.xlu0 %v939, 8
    %v954 = vpop.permute.xlu0 %953
    %v955 = vadd.f32 %v939, %v954
    %956 = vrot.lane.b32.xlu0 %v952, 8
    %v957 = vpop.permute.xlu0 %956
    %v958 = vadd.f32 %v952, %v957
    %959 = vrot.lane.b32.xlu0 %v955, 16
    %v960 = vpop.permute.xlu0 %959
    %v961 = vadd.f32 %v955, %v960
    %962 = vrot.lane.b32.xlu0 %v958, 16
    %v963 = vpop.permute.xlu0 %962
    %v964 = vadd.f32 %v958, %v963
    %965 = vrot.lane.b32.xlu0 %v961, 32
    %v966 = vpop.permute.xlu0 %965
    %v967 = vadd.f32 %v961, %v966
    %968 = vrot.lane.b32.xlu0 %v964, 32
    %v969 = vpop.permute.xlu0 %968
    %v970 = vadd.f32 %v964, %v969
    %971 = vrot.lane.b32.xlu0 %v967, 64
    %v972 = vpop.permute.xlu0 %971
    %v973 = vadd.f32 %v967, %v972
    %974 = vrot.lane.b32.xlu0 %v970, 64
    %v975 = vpop.permute.xlu0 %974
    %v976 = vadd.f32 %v970, %v975
    %v977 = vmul.f32 %v973, 0.001953125
    %v978 = vmul.f32 %v976, 0.001953125
    %v979 = vmul.f32 %v977, %v977
    %v980 = vsub.f32 %v978, %v979
    %v981 = vadd.f32 %v980, 1e-05
    %v982 = vrsqrt.pop %v981
    %v983 = vmul.f32 %v929, %v982
    %v984 = vmul.f32 %v977, %v983
    %v985 = vsub.f32 %v930, %v984
    %v987 = vlaneseq
    %v988 = vshrl.u32 %v987, 7
    %v989 = vsub.s32 0, %v988
    %v990 = vrot.slane %v983, %v989
    %v992 = vmul.f32 %v925, %v990
    %v993 = vmul.f32 %v926, %v990
    %v994 = vmul.f32 %v927, %v990
    %v995 = vmul.f32 %v928, %v990
    %v997 = vlaneseq
    %v998 = vshrl.u32 %v997, 7
    %v999 = vsub.s32 0, %v998
    %v1000 = vrot.slane %v985, %v999
    %v1002 = vadd.f32 %v992, %v1000
    %v1003 = vadd.f32 %v993, %v1000
    %v1004 = vadd.f32 %v994, %v1000
    %v1005 = vadd.f32 %v995, %v1000
    %v1006 = vadd.f32 %v1002, %v89
    %v1007 = vadd.f32 %v1003, %v91
    %v1008 = vadd.f32 %v1004, %v94
    %v1009 = vadd.f32 %v1005, %v96
    %v1010 = vmax.f32 %v1006, 0.0
    %v1011 = vmax.f32 %v1007, 0.0
    %v1012 = vmax.f32 %v1008, 0.0
    %v1013 = vmax.f32 %v1009, 0.0
    %1014 = vst [vmem:[#allocation8] sm:$0xff] %v1010
    %1015 = vst [vmem:[#allocation8 + $0x8] sm:$0xff] %v1011
    %1016 = vst [vmem:[#allocation8 + $0x10] sm:$0xff] %v1012
    %1017 = vst [vmem:[#allocation8 + $0x18] sm:$0xff] %v1013
    // Predicated region
    $region38: #{tpu_custom_call.1} parent=1 // pred_check
      _
    $region39: #{tpu_custom_call.1} parent=1 // pred_check_branch
      %1019 = sbr.rel (0) target = $region41
    $region40: #{tpu_custom_call.1} parent=1 // pred_region
      %s1021 = ssub.s32 512, 512
      %1022 = vsyncadd [#allocation5], %s1021
      %s1023 = sshll.u32 [#allocation8], 4
      %s1024 = int_to_ptr.vmem [resolvable:$true] %s1023
      %1029 = dma.vmem_to_hbm [thread:$0]  %s1024, 512, %s7, [#allocation5], 128, 128, 8
    $region41: #{tpu_custom_call.1} parent=1 // pred_fallthru
      _
    // Predicated region
    $region42: #{tpu_custom_call.1} parent=1 // pred_check
      _
    $region43: #{tpu_custom_call.1} parent=1 // pred_check_branch
      %1031 = sbr.rel (0) target = $region45
    $region44: #{tpu_custom_call.1} parent=1 // pred_region
      %1032 = dma.done [#allocation5], 512
    $region45: #{tpu_custom_call.1} parent=1 // pred_fallthru
      _
    %1033 = vsyncpa [#allocation4], 1
    %1034 = vsyncpa [#allocation7], 1
    %1035 = vsyncpa [#allocation5], 1

</llo_original>
